<compile_context>
chip_gen: v6e
topology: v6e:2x2x1
jax: 0.10.0
libtpu: 0.0.40
codegen_flags: <defaults>
</compile_context>

<pallas_src>
import functools
import math

import jax
import jax.numpy as jnp
from jax import lax
from jax.experimental import pallas as pl
from jax.experimental.pallas import tpu as pltpu

NEG_INF = -1e30  # finite "minus infinity" (avoids inf-inf NaNs on padded rows)


def _round_up(x, m):
    return (x + m - 1) // m * m


def _pad2d(a, rows, cols, dtype):
    out = jnp.zeros((rows, cols), dtype)
    return out.at[: a.shape[0], : a.shape[1]].set(a.astype(dtype))


# ---------------------------------------------------------------------------
# Kernel 1: fused Q/K/V projection (scale folded into Q).
# ---------------------------------------------------------------------------
def _qkv_proj_kernel(x_ref, wq_ref, wk_ref, wv_ref, q_ref, k_ref, v_ref, *, scale):
    x = x_ref[...]  # (TR, Din_pad) in compute dtype
    q = jnp.dot(x, wq_ref[...], preferred_element_type=jnp.float32)
    k = jnp.dot(x, wk_ref[...], preferred_element_type=jnp.float32)
    v = jnp.dot(x, wv_ref[...], preferred_element_type=jnp.float32)
    q_ref[...] = (q * scale).astype(q_ref.dtype)  # 1/sqrt(d_out) applied to Q, not scores
    k_ref[...] = k.astype(k_ref.dtype)
    v_ref[...] = v.astype(v_ref.dtype)


def _qkv_projection(x_pad, wq_pad, wk_pad, wv_pad, *, scale, row_block, compute_dtype):
    s_pad, d_in_pad = x_pad.shape
    d_out_pad = wq_pad.shape[1]
    n_rows = s_pad // row_block
    w_spec = pl.BlockSpec((d_in_pad, d_out_pad), lambda i: (0, 0))
    qkv_spec = pl.BlockSpec((row_block, d_out_pad), lambda i: (i, 0))
    out_sds = jax.ShapeDtypeStruct((s_pad, d_out_pad), compute_dtype)
    return pl.pallas_call(
        functools.partial(_qkv_proj_kernel, scale=scale),
        out_shape=(out_sds, out_sds, out_sds),
        grid=(n_rows,),
        in_specs=[
            pl.BlockSpec((row_block, d_in_pad), lambda i: (i, 0)),
            w_spec, w_spec, w_spec,
        ],
        out_specs=(qkv_spec, qkv_spec, qkv_spec),
        compiler_params=pltpu.CompilerParams(dimension_semantics=("parallel",)),
    )(x_pad, wq_pad, wk_pad, wv_pad)


# ---------------------------------------------------------------------------
# Kernel 2: flash-style attention with online softmax.
# ---------------------------------------------------------------------------
def _flash_kernel(q_ref, k_ref, v_ref, o_ref, m_ref, l_ref, acc_ref,
                  *, seq_len, kv_block, needs_mask):
    ki = pl.program_id(1)

    @pl.when(ki == 0)
    def _():
        m_ref[...] = jnp.full(m_ref.shape, NEG_INF, dtype=m_ref.dtype)
        l_ref[...] = jnp.zeros(l_ref.shape, dtype=l_ref.dtype)
        acc_ref[...] = jnp.zeros(acc_ref.shape, dtype=acc_ref.dtype)

    # scores = Q @ K^T without materializing a transpose (contract last axes).
    s = lax.dot_general(
        q_ref[...], k_ref[...],
        dimension_numbers=(((1,), (1,)), ((), ())),
        preferred_element_type=jnp.float32,
    )  # (TQ, TK) f32; Q was pre-scaled by 1/sqrt(d_out)

    if needs_mask:  # static: only emitted when the sequence was padded
        kv_idx = ki * kv_block + lax.broadcasted_iota(jnp.int32, s.shape, 1)
        s = jnp.where(kv_idx < seq_len, s, NEG_INF)

    # Online softmax update (all statistics in f32).
    m_prev = m_ref[...]
    m_new = jnp.maximum(m_prev, jnp.max(s, axis=-1, keepdims=True))
    alpha = jnp.exp(m_prev - m_new)
    p = jnp.exp(s - m_new)
    l_ref[...] = alpha * l_ref[...] + jnp.sum(p, axis=-1, keepdims=True)
    acc_ref[...] = alpha * acc_ref[...] + jnp.dot(
        p.astype(v_ref.dtype), v_ref[...], preferred_element_type=jnp.float32
    )
    m_ref[...] = m_new

    @pl.when(ki == pl.num_programs(1) - 1)
    def _():
        # Deferred normalization: EUP approx reciprocal + one Newton step on a
        # (TQ, 1) vector (keeps f32 accuracy, no (S,S) broadcast multiply).
        l = l_ref[...]
        inv = pl.reciprocal(l, approx=True)
        inv = inv * (2.0 - l * inv)
        o_ref[...] = (acc_ref[...] * inv).astype(o_ref.dtype)


def _flash_attention(q, k, v, *, seq_len, q_block, kv_block):
    s_pad, d_pad = q.shape
    nq, nk = s_pad // q_block, s_pad // kv_block
    return pl.pallas_call(
        functools.partial(
            _flash_kernel,
            seq_len=seq_len,
            kv_block=kv_block,
            needs_mask=(s_pad != seq_len),
        ),
        out_shape=jax.ShapeDtypeStruct((s_pad, d_pad), jnp.float32),
        grid=(nq, nk),
        in_specs=[
            pl.BlockSpec((q_block, d_pad), lambda qi, ki: (qi, 0)),
            pl.BlockSpec((kv_block, d_pad), lambda qi, ki: (ki, 0)),
            pl.BlockSpec((kv_block, d_pad), lambda qi, ki: (ki, 0)),
        ],
        out_specs=pl.BlockSpec((q_block, d_pad), lambda qi, ki: (qi, 0)),
        scratch_shapes=[
            pltpu.VMEM((q_block, 1), jnp.float32),      # running max m
            pltpu.VMEM((q_block, 1), jnp.float32),      # running denom l
            pltpu.VMEM((q_block, d_pad), jnp.float32),  # unnormalized acc
        ],
        compiler_params=pltpu.CompilerParams(
            dimension_semantics=("parallel", "arbitrary")
        ),
    )(q, k, v)


# ---------------------------------------------------------------------------
# Wrapper: pads to lane-dense shapes, runs both kernels, slices the result.
# ---------------------------------------------------------------------------
def self_attention_v2(x, w_query, w_key, w_value, *,
                      q_block=128, kv_block=128,
                      compute_dtype=jnp.bfloat16):
    S, d_in = x.shape
    d_out = w_query.shape[1]

    # Tile / padding geometry (lane dim -> multiple of 128, rows -> of 8).
    tq = min(q_block, _round_up(S, 8))
    tk = min(kv_block, _round_up(S, 8))
    s_pad = _round_up(S, math.lcm(tq, tk))
    d_in_pad = _round_up(d_in, 128)
    d_out_pad = _round_up(d_out, 128)

    # Zero-pad and cast MXU operands to the compute dtype (bf16 by default).
    x_pad = _pad2d(x, s_pad, d_in_pad, compute_dtype)
    wq_pad = _pad2d(w_query, d_in_pad, d_out_pad, compute_dtype)
    wk_pad = _pad2d(w_key, d_in_pad, d_out_pad, compute_dtype)
    wv_pad = _pad2d(w_value, d_in_pad, d_out_pad, compute_dtype)

    scale = 1.0 / math.sqrt(d_out)  # uses the REAL head dim, matching keys.shape[-1]**0.5

    q, k, v = _qkv_projection(
        x_pad, wq_pad, wk_pad, wv_pad,
        scale=scale, row_block=tq, compute_dtype=compute_dtype,
    )
    out_pad = _flash_attention(q, k, v, seq_len=S, q_block=tq, kv_block=tk)
    return out_pad[:S, :d_out]


def reference(x, w_query, w_key, w_value):
    q = x @ w_query
    k = x @ w_key
    v = x @ w_value
    scores = q @ k.T
    w = jax.nn.softmax(scores / (k.shape[-1] ** 0.5), axis=1)
    return w @ v


if __name__ == "__main__":
    # --- Case 1: the exact chapter3.py toy problem (6 tokens, d_in=3, d_out=2)
    inputs = jnp.array(
        [[0.43, 0.15, 0.89],
         [0.55, 0.87, 0.66],
         [0.57, 0.85, 0.64],
         [0.22, 0.58, 0.33],
         [0.77, 0.25, 0.10],
         [0.05, 0.80, 0.55]],
        dtype=jnp.float32,
    )
    d_in, d_out = 3, 2
    key = jax.random.PRNGKey(0)
    kq, kk, kv = jax.random.split(key, 3)
    w_query = jax.random.uniform(kq, (d_in, d_out), dtype=jnp.float32)
    w_key = jax.random.uniform(kk, (d_in, d_out), dtype=jnp.float32)
    w_value = jax.random.uniform(kv, (d_in, d_out), dtype=jnp.float32)

    ref1 = reference(inputs, w_query, w_key, w_value)

    out_f32 = jax.block_until_ready(
        self_attention_v2(inputs, w_query, w_key, w_value,
                          compute_dtype=jnp.float32))
    assert jnp.allclose(out_f32, ref1, atol=1e-4, rtol=1e-4), (out_f32, ref1)

    out_bf16 = jax.block_until_ready(
        self_attention_v2(inputs, w_query, w_key, w_value,
                          compute_dtype=jnp.bfloat16))
    assert jnp.allclose(out_bf16, ref1, atol=3e-2, rtol=3e-2), (out_bf16, ref1)

    # --- Case 2: a non-toy shape exercising multiple query/KV tiles, grid
    #     pipelining, sequence padding/masking and the online-softmax carry.
    k2 = jax.random.PRNGKey(0)
    ka, kb, kc, kd = jax.random.split(k2, 4)
    S2, din2, dout2 = 200, 48, 64
    x2 = jax.random.normal(ka, (S2, din2), dtype=jnp.float32) * 0.2
    wq2 = jax.random.normal(kb, (din2, dout2), dtype=jnp.float32) * 0.2
    wk2 = jax.random.normal(kc, (din2, dout2), dtype=jnp.float32) * 0.2
    wv2 = jax.random.normal(kd, (din2, dout2), dtype=jnp.float32) * 0.2
    ref2 = reference(x2, wq2, wk2, wv2)

    out2_f32 = jax.block_until_ready(
        self_attention_v2(x2, wq2, wk2, wv2, compute_dtype=jnp.float32))
    assert jnp.allclose(out2_f32, ref2, atol=1e-4, rtol=1e-4), "f32 mismatch (case 2)"

    out2_bf16 = jax.block_until_ready(
        self_attention_v2(x2, wq2, wk2, wv2, compute_dtype=jnp.bfloat16))
    assert jnp.allclose(out2_bf16, ref2, atol=1e-2, rtol=5e-2), "bf16 mismatch (case 2)"

    print("KERNEL_OK")
</pallas_src>

<mosaic_0001>
module attributes {stable_mosaic.version = 11 : i64} {
  func.func @_qkv_proj_kernel(%arg0: i32, %arg1: memref<8x128xf32, #tpu.memory_space<vmem>>, %arg2: memref<128x128xf32, #tpu.memory_space<vmem>>, %arg3: memref<128x128xf32, #tpu.memory_space<vmem>>, %arg4: memref<128x128xf32, #tpu.memory_space<vmem>>, %arg5: memref<8x128xf32, #tpu.memory_space<vmem>>, %arg6: memref<8x128xf32, #tpu.memory_space<vmem>>, %arg7: memref<8x128xf32, #tpu.memory_space<vmem>>) attributes {dimension_semantics = [#tpu.dimension_semantics<parallel>], iteration_bounds = array<i64: 1>, scalar_prefetch = 0 : i64, scratch_operands = 0 : i64, tpu.core_type = #tpu.core_type<tc>, window_params = [{transform_indices = @transform_0, window_bounds = array<i64: 8, 128>}, {pipeline_mode = #tpu.pipeline_mode<synchronous>, transform_indices = @transform_1, window_bounds = array<i64: 128, 128>}, {pipeline_mode = #tpu.pipeline_mode<synchronous>, transform_indices = @transform_2, window_bounds = array<i64: 128, 128>}, {pipeline_mode = #tpu.pipeline_mode<synchronous>, transform_indices = @transform_3, window_bounds = array<i64: 128, 128>}, {transform_indices = @transform_4, window_bounds = array<i64: 8, 128>}, {transform_indices = @transform_5, window_bounds = array<i64: 8, 128>}, {transform_indices = @transform_6, window_bounds = array<i64: 8, 128>}]} {
    %c0 = arith.constant 0 : index
    %c0_0 = arith.constant 0 : index
    %0 = vector.load %arg1[%c0, %c0_0] : memref<8x128xf32, #tpu.memory_space<vmem>>, vector<8x128xf32>
    %c0_1 = arith.constant 0 : index
    %c0_2 = arith.constant 0 : index
    %1 = vector.load %arg2[%c0_1, %c0_2] : memref<128x128xf32, #tpu.memory_space<vmem>>, vector<128x128xf32>
    %cst = arith.constant dense<0.000000e+00> : vector<8x128xf32>
    %2 = tpu.matmul %0, %1, %cst {dimension_numbers = #tpu.dot_dimension_numbers<[1], [0], [0], [1], [0, 0, 1, 1], [], []>} : vector<8x128xf32>, vector<128x128xf32>, vector<8x128xf32> -> vector<8x128xf32>
    %c0_3 = arith.constant 0 : index
    %c0_4 = arith.constant 0 : index
    %3 = vector.load %arg3[%c0_3, %c0_4] : memref<128x128xf32, #tpu.memory_space<vmem>>, vector<128x128xf32>
    %cst_5 = arith.constant dense<0.000000e+00> : vector<8x128xf32>
    %4 = tpu.matmul %0, %3, %cst_5 {dimension_numbers = #tpu.dot_dimension_numbers<[1], [0], [0], [1], [0, 0, 1, 1], [], []>} : vector<8x128xf32>, vector<128x128xf32>, vector<8x128xf32> -> vector<8x128xf32>
    %c0_6 = arith.constant 0 : index
    %c0_7 = arith.constant 0 : index
    %5 = vector.load %arg4[%c0_6, %c0_7] : memref<128x128xf32, #tpu.memory_space<vmem>>, vector<128x128xf32>
    %cst_8 = arith.constant dense<0.000000e+00> : vector<8x128xf32>
    %6 = tpu.matmul %0, %5, %cst_8 {dimension_numbers = #tpu.dot_dimension_numbers<[1], [0], [0], [1], [0, 0, 1, 1], [], []>} : vector<8x128xf32>, vector<128x128xf32>, vector<8x128xf32> -> vector<8x128xf32>
    %cst_9 = arith.constant 0.707106769 : f32
    %7 = vector.broadcast %cst_9 : f32 to vector<8x128xf32>
    %8 = arith.mulf %2, %7 : vector<8x128xf32>
    %c0_10 = arith.constant 0 : index
    %c0_11 = arith.constant 0 : index
    %9 = vector.load %arg5[%c0_10, %c0_11] : memref<8x128xf32, #tpu.memory_space<vmem>>, vector<8x128xf32>
    tpu.vector_store %arg5[%c0_10, %c0_11], %8 {strides = array<i32>} : memref<8x128xf32, #tpu.memory_space<vmem>>, vector<8x128xf32>,
    %c0_12 = arith.constant 0 : index
    %c0_13 = arith.constant 0 : index
    %10 = vector.load %arg6[%c0_12, %c0_13] : memref<8x128xf32, #tpu.memory_space<vmem>>, vector<8x128xf32>
    tpu.vector_store %arg6[%c0_12, %c0_13], %4 {strides = array<i32>} : memref<8x128xf32, #tpu.memory_space<vmem>>, vector<8x128xf32>,
    %c0_14 = arith.constant 0 : index
    %c0_15 = arith.constant 0 : index
    %11 = vector.load %arg7[%c0_14, %c0_15] : memref<8x128xf32, #tpu.memory_space<vmem>>, vector<8x128xf32>
    tpu.vector_store %arg7[%c0_14, %c0_15], %6 {strides = array<i32>} : memref<8x128xf32, #tpu.memory_space<vmem>>, vector<8x128xf32>,
    return
  }
  func.func @transform_0(%arg0: i32) -> (i32, i32) {
    %c0_i32 = arith.constant 0 : i32
    %c0_i32_0 = arith.constant 0 : i32
    return %arg0, %c0_i32 : i32, i32
  }
  func.func @transform_1(%arg0: i32) -> (i32, i32) {
    %c0_i32 = arith.constant 0 : i32
    %c0_i32_0 = arith.constant 0 : i32
    %c0_i32_1 = arith.constant 0 : i32
    return %c0_i32, %c0_i32_0 : i32, i32
  }
  func.func @transform_2(%arg0: i32) -> (i32, i32) {
    %c0_i32 = arith.constant 0 : i32
    %c0_i32_0 = arith.constant 0 : i32
    %c0_i32_1 = arith.constant 0 : i32
    return %c0_i32, %c0_i32_0 : i32, i32
  }
  func.func @transform_3(%arg0: i32) -> (i32, i32) {
    %c0_i32 = arith.constant 0 : i32
    %c0_i32_0 = arith.constant 0 : i32
    %c0_i32_1 = arith.constant 0 : i32
    return %c0_i32, %c0_i32_0 : i32, i32
  }
  func.func @transform_4(%arg0: i32) -> (i32, i32) {
    %c0_i32 = arith.constant 0 : i32
    %c0_i32_0 = arith.constant 0 : i32
    return %arg0, %c0_i32 : i32, i32
  }
  func.func @transform_5(%arg0: i32) -> (i32, i32) {
    %c0_i32 = arith.constant 0 : i32
    %c0_i32_0 = arith.constant 0 : i32
    return %arg0, %c0_i32 : i32, i32
  }
  func.func @transform_6(%arg0: i32) -> (i32, i32) {
    %c0_i32 = arith.constant 0 : i32
    %c0_i32_0 = arith.constant 0 : i32
    return %arg0, %c0_i32 : i32, i32
  }
}

</mosaic_0001>

<llo_original>
// kernel: tpu_custom_call.1
$region0: #{tpu_custom_call.1}
  #allocation0 [shape = 'u32[]', space=smem, size = 0x4, offset = 0x4, fixed_abs, tag = 'smem constant byte address 0x4 - core index']
  #allocation1 [shape = 'u32[144,128]{1,0:T(1,128)}', space=vmem, size = 0x12000, scoped, tag = 'internal scratch']
  %s0 = inlined_call_operand.hbm [shape: f32[8,128], index: 0, kind: input, shape index: {}]
  %s1 = inlined_call_operand.hbm [shape: f32[128,128], index: 1, kind: input, shape index: {}]
  %s2 = inlined_call_operand.hbm [shape: f32[128,128], index: 2, kind: input, shape index: {}]
  %s3 = inlined_call_operand.hbm [shape: f32[128,128], index: 3, kind: input, shape index: {}]
  %s4 = inlined_call_operand.hbm [shape: f32[8,128], index: 4, kind: output, shape index: {0}]
  %s5 = inlined_call_operand.hbm [shape: f32[8,128], index: 5, kind: output, shape index: {1}]
  %s6 = inlined_call_operand.hbm [shape: f32[8,128], index: 6, kind: output, shape index: {2}]
  %7 = xla_tuple %s4, %s5, %s6
  %s8 = sld [smem:[#allocation0]]
  $region58: #{tpu_custom_call.1} parent=0
    _
  %s10 = ssub.s32 1, %s8
  %s11 = scalar_select 0, %s10, %s8
  $region1: #{tpu_custom_call.1} parent=0
    #allocation2 [shape = 'u8[4096]{0}', space=vmem, size = 0x1000, scoped, tag = 'input window, operand 0, single buffered']
    #allocation3 [shape = 's32[1]{0}', space=sflag, size = 0x4, scoped, tag = 'scoped memory for tpu_custom_call.1']
    #allocation4 [shape = 's32[1]{0}', space=sflag, size = 0x4, scoped, tag = 'scoped memory for tpu_custom_call.1']
    #allocation5 [shape = 'u8[65536]{0}', space=vmem, size = 0x10000, scoped, tag = 'input window, operand 1, single buffered']
    #allocation6 [shape = 's32[1]{0}', space=sflag, size = 0x4, scoped, tag = 'scoped memory for tpu_custom_call.1']
    #allocation7 [shape = 'u8[65536]{0}', space=vmem, size = 0x10000, scoped, tag = 'input window, operand 2, single buffered']
    #allocation8 [shape = 'u8[65536]{0}', space=vmem, size = 0x10000, scoped, tag = 'input window, operand 3, single buffered']
    #allocation9 [shape = 's32[1]{0}', space=sflag, size = 0x4, scoped, tag = 'scoped memory for tpu_custom_call.1']
    #allocation10 [shape = 'u8[4096]{0}', space=vmem, size = 0x1000, scoped, tag = 'output window, operand 0, single buffered']
    #allocation11 [shape = 'u8[4096]{0}', space=vmem, size = 0x1000, scoped, tag = 'output window, operand 1, single buffered']
    #allocation12 [shape = 's32[1]{0}', space=sflag, size = 0x4, scoped, tag = 'scoped memory for tpu_custom_call.1']
    #allocation13 [shape = 'u8[4096]{0}', space=vmem, size = 0x1000, scoped, tag = 'output window, operand 2, single buffered']
    %12 = vsyncpa [#allocation3], 0
    %13 = vsyncpa [#allocation6], 0
    %14 = vsyncpa [#allocation9], 0
    %15 = vsyncpa [#allocation4], 0
    %16 = vsyncpa [#allocation12], 0
    // Predicated region
    $region2: #{tpu_custom_call.1} parent=1 // pred_check
      _
    $region3: #{tpu_custom_call.1} parent=1 // pred_check_branch
      %18 = sbr.rel (0) target = $region5
    $region4: #{tpu_custom_call.1} parent=1 // pred_region
      %s20 = ssub.s32 128, 128
      %21 = vsyncadd [#allocation3], %s20
      %s23 = sshll.u32 [#allocation2], 4
      %s24 = int_to_ptr.vmem [resolvable:$true] %s23
      %26 = dma.hbm_to_vmem [thread:$0]  %s0, 128, %s24, [#allocation3]
    $region5: #{tpu_custom_call.1} parent=1 // pred_fallthru
      _
    // Predicated region
    $region6: #{tpu_custom_call.1} parent=1 // pred_check
      _
    $region7: #{tpu_custom_call.1} parent=1 // pred_check_branch
      %28 = sbr.rel (0) target = $region9
    $region8: #{tpu_custom_call.1} parent=1 // pred_region
      %s30 = ssub.s32 2048, 2048
      %31 = vsyncadd [#allocation6], %s30
      %s32 = sshll.u32 [#allocation5], 4
      %s33 = int_to_ptr.vmem [resolvable:$true] %s32
      %38 = dma.hbm_to_vmem [thread:$0]  %s1, 2048, %s33, [#allocation6], 128, 128, 8
    $region9: #{tpu_custom_call.1} parent=1 // pred_fallthru
      _
    // Predicated region
    $region10: #{tpu_custom_call.1} parent=1 // pred_check
      _
    $region11: #{tpu_custom_call.1} parent=1 // pred_check_branch
      %40 = sbr.rel (0) target = $region13
    $region12: #{tpu_custom_call.1} parent=1 // pred_region
      %s42 = ssub.s32 2048, 2048
      %43 = vsyncadd [#allocation6], %s42
      %s44 = sshll.u32 [#allocation7], 4
      %s45 = int_to_ptr.vmem [resolvable:$true] %s44
      %50 = dma.hbm_to_vmem [thread:$0]  %s2, 2048, %s45, [#allocation6], 128, 128, 8
    $region13: #{tpu_custom_call.1} parent=1 // pred_fallthru
      _
    // Predicated region
    $region14: #{tpu_custom_call.1} parent=1 // pred_check
      _
    $region15: #{tpu_custom_call.1} parent=1 // pred_check_branch
      %52 = sbr.rel (0) target = $region17
    $region16: #{tpu_custom_call.1} parent=1 // pred_region
      %s54 = ssub.s32 2048, 2048
      %55 = vsyncadd [#allocation9], %s54
      %s56 = sshll.u32 [#allocation8], 4
      %s57 = int_to_ptr.vmem [resolvable:$true] %s56
      %62 = dma.hbm_to_vmem [thread:$0]  %s3, 2048, %s57, [#allocation9], 128, 128, 8
    $region17: #{tpu_custom_call.1} parent=1 // pred_fallthru
      _
    // Predicated region
    $region18: #{tpu_custom_call.1} parent=1 // pred_check
      _
    $region19: #{tpu_custom_call.1} parent=1 // pred_check_branch
      %64 = sbr.rel (0) target = $region21
    $region20: #{tpu_custom_call.1} parent=1 // pred_region
      %65 = dma.done [#allocation3], 128
    $region21: #{tpu_custom_call.1} parent=1 // pred_fallthru
      _
    // Predicated region
    $region22: #{tpu_custom_call.1} parent=1 // pred_check
      _
    $region23: #{tpu_custom_call.1} parent=1 // pred_check_branch
      %67 = sbr.rel (0) target = $region25
    $region24: #{tpu_custom_call.1} parent=1 // pred_region
      %68 = dma.done [#allocation6], 2048
    $region25: #{tpu_custom_call.1} parent=1 // pred_fallthru
      _
    // Predicated region
    $region26: #{tpu_custom_call.1} parent=1 // pred_check
      _
    $region27: #{tpu_custom_call.1} parent=1 // pred_check_branch
      %70 = sbr.rel (0) target = $region29
    $region28: #{tpu_custom_call.1} parent=1 // pred_region
      %71 = dma.done [#allocation6], 2048
    $region29: #{tpu_custom_call.1} parent=1 // pred_fallthru
      _
    // Predicated region
    $region30: #{tpu_custom_call.1} parent=1 // pred_check
      _
    $region31: #{tpu_custom_call.1} parent=1 // pred_check_branch
      %73 = sbr.rel (0) target = $region33
    $region32: #{tpu_custom_call.1} parent=1 // pred_region
      %74 = dma.done [#allocation9], 2048
    $region33: #{tpu_custom_call.1} parent=1 // pred_fallthru
      _
    %v75 = vld [vmem:[#allocation2] sm:$0xff]
    %v76 = vld [vmem:[#allocation5] sm:$0xff]
    %v77 = vld [vmem:[#allocation5 + $0x8] sm:$0xff]
    %v78 = vld [vmem:[#allocation5 + $0x10] sm:$0xff]
    %v79 = vld [vmem:[#allocation5 + $0x18] sm:$0xff]
    %v80 = vld [vmem:[#allocation5 + $0x20] sm:$0xff]
    %v81 = vld [vmem:[#allocation5 + $0x28] sm:$0xff]
    %v82 = vld [vmem:[#allocation5 + $0x30] sm:$0xff]
    %v83 = vld [vmem:[#allocation5 + $0x38] sm:$0xff]
    %v84 = vld [vmem:[#allocation5 + $0x40] sm:$0xff]
    %v85 = vld [vmem:[#allocation5 + $0x48] sm:$0xff]
    %v86 = vld [vmem:[#allocation5 + $0x50] sm:$0xff]
    %v87 = vld [vmem:[#allocation5 + $0x58] sm:$0xff]
    %v88 = vld [vmem:[#allocation5 + $0x60] sm:$0xff]
    %v89 = vld [vmem:[#allocation5 + $0x68] sm:$0xff]
    %v90 = vld [vmem:[#allocation5 + $0x70] sm:$0xff]
    %v91 = vld [vmem:[#allocation5 + $0x78] sm:$0xff]
    %92 = vmatprep.subr.mxu0 0.0
    %93 = vmatpush1.msra.mxu0 %v91
    %94 = vmatprep.subr.mxu0 0.0
    %95 = vmatpush1.msra.mxu0 %v90
    %96 = vmatprep.subr.mxu0 0.0
    %97 = vmatpush1.msra.mxu0 %v89
    %98 = vmatprep.subr.mxu0 0.0
    %99 = vmatpush1.msra.mxu0 %v88
    %100 = vmatprep.subr.mxu0 0.0
    %101 = vmatpush1.msra.mxu0 %v87
    %102 = vmatprep.subr.mxu0 0.0
    %103 = vmatpush1.msra.mxu0 %v86
    %104 = vmatprep.subr.mxu0 0.0
    %105 = vmatpush1.msra.mxu0 %v85
    %106 = vmatprep.subr.mxu0 0.0
    %107 = vmatpush1.msra.mxu0 %v84
    %108 = vmatprep.subr.mxu0 0.0
    %109 = vmatpush1.msra.mxu0 %v83
    %110 = vmatprep.subr.mxu0 0.0
    %111 = vmatpush1.msra.mxu0 %v82
    %112 = vmatprep.subr.mxu0 0.0
    %113 = vmatpush1.msra.mxu0 %v81
    %114 = vmatprep.subr.mxu0 0.0
    %115 = vmatpush1.msra.mxu0 %v80
    %116 = vmatprep.subr.mxu0 0.0
    %117 = vmatpush1.msra.mxu0 %v79
    %118 = vmatprep.subr.mxu0 0.0
    %119 = vmatpush1.msra.mxu0 %v78
    %120 = vmatprep.subr.mxu0 0.0
    %121 = vmatpush1.msra.mxu0 %v77
    %122 = vmatprep.subr.mxu0 0.0
    %123 = vmatpush1.msra.mxu0 %v76
    %124 = vmatprep.subr.mxu0 0.0
    %125 = vmatpush2.msra.mxu0 0.0
    %126 = vmatprep.subr.mxu0 0.0
    %127 = vmatpush2.msra.mxu0 0.0
    %128 = vmatprep.subr.mxu0 0.0
    %129 = vmatpush2.msra.mxu0 0.0
    %130 = vmatprep.subr.mxu0 0.0
    %131 = vmatpush2.msra.mxu0 0.0
    %132 = vmatprep.subr.mxu0 0.0
    %133 = vmatpush2.msra.mxu0 0.0
    %134 = vmatprep.subr.mxu0 0.0
    %135 = vmatpush2.msra.mxu0 0.0
    %136 = vmatprep.subr.mxu0 0.0
    %137 = vmatpush2.msra.mxu0 0.0
    %138 = vmatprep.subr.mxu0 0.0
    %139 = vmatpush2.msra.mxu0 0.0
    %140 = vmatprep.subr.mxu0 0.0
    %141 = vmatpush2.msra.mxu0 0.0
    %142 = vmatprep.subr.mxu0 0.0
    %143 = vmatpush2.msra.mxu0 0.0
    %144 = vmatprep.subr.mxu0 0.0
    %145 = vmatpush2.msra.mxu0 0.0
    %146 = vmatprep.subr.mxu0 0.0
    %147 = vmatpush2.msra.mxu0 0.0
    %148 = vmatprep.subr.mxu0 0.0
    %149 = vmatpush2.msra.mxu0 0.0
    %150 = vmatprep.subr.mxu0 0.0
    %151 = vmatpush2.msra.mxu0 0.0
    %152 = vmatprep.subr.mxu0 0.0
    %153 = vmatpush2.msra.mxu0 0.0
    %154 = vmatprep.subr.mxu0 0.0
    %155 = vmatpush2.msra.mxu0 0.0
    %156 = vmatprep.mubr.f32.mxu0 0.0
    %157 = vmatmul.mubr.f32.gmra.mxu0 %v75
    %v158 = vpop.f32.mrf.mxu0
    %v159 = vadd.f32 0.0, %v158
    %v160 = vpop.f32.mrf.mxu0
    %161 = vdwg.mxu0
    %v162 = vld [vmem:[#allocation7] sm:$0xff]
    %v163 = vld [vmem:[#allocation7 + $0x8] sm:$0xff]
    %v164 = vld [vmem:[#allocation7 + $0x10] sm:$0xff]
    %v165 = vld [vmem:[#allocation7 + $0x18] sm:$0xff]
    %v166 = vld [vmem:[#allocation7 + $0x20] sm:$0xff]
    %v167 = vld [vmem:[#allocation7 + $0x28] sm:$0xff]
    %v168 = vld [vmem:[#allocation7 + $0x30] sm:$0xff]
    %v169 = vld [vmem:[#allocation7 + $0x38] sm:$0xff]
    %v170 = vld [vmem:[#allocation7 + $0x40] sm:$0xff]
    %v171 = vld [vmem:[#allocation7 + $0x48] sm:$0xff]
    %v172 = vld [vmem:[#allocation7 + $0x50] sm:$0xff]
    %v173 = vld [vmem:[#allocation7 + $0x58] sm:$0xff]
    %v174 = vld [vmem:[#allocation7 + $0x60] sm:$0xff]
    %v175 = vld [vmem:[#allocation7 + $0x68] sm:$0xff]
    %v176 = vld [vmem:[#allocation7 + $0x70] sm:$0xff]
    %v177 = vld [vmem:[#allocation7 + $0x78] sm:$0xff]
    %178 = vmatprep.subr.mxu0 0.0
    %179 = vmatpush1.msra.mxu0 %v177
    %180 = vmatprep.subr.mxu0 0.0
    %181 = vmatpush1.msra.mxu0 %v176
    %182 = vmatprep.subr.mxu0 0.0
    %183 = vmatpush1.msra.mxu0 %v175
    %184 = vmatprep.subr.mxu0 0.0
    %185 = vmatpush1.msra.mxu0 %v174
    %186 = vmatprep.subr.mxu0 0.0
    %187 = vmatpush1.msra.mxu0 %v173
    %188 = vmatprep.subr.mxu0 0.0
    %189 = vmatpush1.msra.mxu0 %v172
    %190 = vmatprep.subr.mxu0 0.0
    %191 = vmatpush1.msra.mxu0 %v171
    %192 = vmatprep.subr.mxu0 0.0
    %193 = vmatpush1.msra.mxu0 %v170
    %194 = vmatprep.subr.mxu0 0.0
    %195 = vmatpush1.msra.mxu0 %v169
    %196 = vmatprep.subr.mxu0 0.0
    %197 = vmatpush1.msra.mxu0 %v168
    %198 = vmatprep.subr.mxu0 0.0
    %199 = vmatpush1.msra.mxu0 %v167
    %200 = vmatprep.subr.mxu0 0.0
    %201 = vmatpush1.msra.mxu0 %v166
    %202 = vmatprep.subr.mxu0 0.0
    %203 = vmatpush1.msra.mxu0 %v165
    %204 = vmatprep.subr.mxu0 0.0
    %205 = vmatpush1.msra.mxu0 %v164
    %206 = vmatprep.subr.mxu0 0.0
    %207 = vmatpush1.msra.mxu0 %v163
    %208 = vmatprep.subr.mxu0 0.0
    %209 = vmatpush1.msra.mxu0 %v162
    %210 = vmatprep.subr.mxu0 0.0
    %211 = vmatpush2.msra.mxu0 0.0
    %212 = vmatprep.subr.mxu0 0.0
    %213 = vmatpush2.msra.mxu0 0.0
    %214 = vmatprep.subr.mxu0 0.0
    %215 = vmatpush2.msra.mxu0 0.0
    %216 = vmatprep.subr.mxu0 0.0
    %217 = vmatpush2.msra.mxu0 0.0
    %218 = vmatprep.subr.mxu0 0.0
    %219 = vmatpush2.msra.mxu0 0.0
    %220 = vmatprep.subr.mxu0 0.0
    %221 = vmatpush2.msra.mxu0 0.0
    %222 = vmatprep.subr.mxu0 0.0
    %223 = vmatpush2.msra.mxu0 0.0
    %224 = vmatprep.subr.mxu0 0.0
    %225 = vmatpush2.msra.mxu0 0.0
    %226 = vmatprep.subr.mxu0 0.0
    %227 = vmatpush2.msra.mxu0 0.0
    %228 = vmatprep.subr.mxu0 0.0
    %229 = vmatpush2.msra.mxu0 0.0
    %230 = vmatprep.subr.mxu0 0.0
    %231 = vmatpush2.msra.mxu0 0.0
    %232 = vmatprep.subr.mxu0 0.0
    %233 = vmatpush2.msra.mxu0 0.0
    %234 = vmatprep.subr.mxu0 0.0
    %235 = vmatpush2.msra.mxu0 0.0
    %236 = vmatprep.subr.mxu0 0.0
    %237 = vmatpush2.msra.mxu0 0.0
    %238 = vmatprep.subr.mxu0 0.0
    %239 = vmatpush2.msra.mxu0 0.0
    %240 = vmatprep.subr.mxu0 0.0
    %241 = vmatpush2.msra.mxu0 0.0
    %242 = vmatprep.mubr.f32.mxu0 0.0
    %243 = vmatmul.mubr.f32.gmra.mxu0 %v75
    %v244 = vpop.f32.mrf.mxu0
    %v245 = vadd.f32 0.0, %v244
    %v246 = vpop.f32.mrf.mxu0
    %247 = vdwg.mxu0
    %v248 = vld [vmem:[#allocation8] sm:$0xff]
    %v249 = vld [vmem:[#allocation8 + $0x8] sm:$0xff]
    %v250 = vld [vmem:[#allocation8 + $0x10] sm:$0xff]
    %v251 = vld [vmem:[#allocation8 + $0x18] sm:$0xff]
    %v252 = vld [vmem:[#allocation8 + $0x20] sm:$0xff]
    %v253 = vld [vmem:[#allocation8 + $0x28] sm:$0xff]
    %v254 = vld [vmem:[#allocation8 + $0x30] sm:$0xff]
    %v255 = vld [vmem:[#allocation8 + $0x38] sm:$0xff]
    %v256 = vld [vmem:[#allocation8 + $0x40] sm:$0xff]
    %v257 = vld [vmem:[#allocation8 + $0x48] sm:$0xff]
    %v258 = vld [vmem:[#allocation8 + $0x50] sm:$0xff]
    %v259 = vld [vmem:[#allocation8 + $0x58] sm:$0xff]
    %v260 = vld [vmem:[#allocation8 + $0x60] sm:$0xff]
    %v261 = vld [vmem:[#allocation8 + $0x68] sm:$0xff]
    %v262 = vld [vmem:[#allocation8 + $0x70] sm:$0xff]
    %v263 = vld [vmem:[#allocation8 + $0x78] sm:$0xff]
    %264 = vmatprep.subr.mxu0 0.0
    %265 = vmatpush1.msra.mxu0 %v263
    %266 = vmatprep.subr.mxu0 0.0
    %267 = vmatpush1.msra.mxu0 %v262
    %268 = vmatprep.subr.mxu0 0.0
    %269 = vmatpush1.msra.mxu0 %v261
    %270 = vmatprep.subr.mxu0 0.0
    %271 = vmatpush1.msra.mxu0 %v260
    %272 = vmatprep.subr.mxu0 0.0
    %273 = vmatpush1.msra.mxu0 %v259
    %274 = vmatprep.subr.mxu0 0.0
    %275 = vmatpush1.msra.mxu0 %v258
    %276 = vmatprep.subr.mxu0 0.0
    %277 = vmatpush1.msra.mxu0 %v257
    %278 = vmatprep.subr.mxu0 0.0
    %279 = vmatpush1.msra.mxu0 %v256
    %280 = vmatprep.subr.mxu0 0.0
    %281 = vmatpush1.msra.mxu0 %v255
    %282 = vmatprep.subr.mxu0 0.0
    %283 = vmatpush1.msra.mxu0 %v254
    %284 = vmatprep.subr.mxu0 0.0
    %285 = vmatpush1.msra.mxu0 %v253
    %286 = vmatprep.subr.mxu0 0.0
    %287 = vmatpush1.msra.mxu0 %v252
    %288 = vmatprep.subr.mxu0 0.0
    %289 = vmatpush1.msra.mxu0 %v251
    %290 = vmatprep.subr.mxu0 0.0
    %291 = vmatpush1.msra.mxu0 %v250
    %292 = vmatprep.subr.mxu0 0.0
    %293 = vmatpush1.msra.mxu0 %v249
    %294 = vmatprep.subr.mxu0 0.0
    %295 = vmatpush1.msra.mxu0 %v248
    %296 = vmatprep.subr.mxu0 0.0
    %297 = vmatpush2.msra.mxu0 0.0
    %298 = vmatprep.subr.mxu0 0.0
    %299 = vmatpush2.msra.mxu0 0.0
    %300 = vmatprep.subr.mxu0 0.0
    %301 = vmatpush2.msra.mxu0 0.0
    %302 = vmatprep.subr.mxu0 0.0
    %303 = vmatpush2.msra.mxu0 0.0
    %304 = vmatprep.subr.mxu0 0.0
    %305 = vmatpush2.msra.mxu0 0.0
    %306 = vmatprep.subr.mxu0 0.0
    %307 = vmatpush2.msra.mxu0 0.0
    %308 = vmatprep.subr.mxu0 0.0
    %309 = vmatpush2.msra.mxu0 0.0
    %310 = vmatprep.subr.mxu0 0.0
    %311 = vmatpush2.msra.mxu0 0.0
    %312 = vmatprep.subr.mxu0 0.0
    %313 = vmatpush2.msra.mxu0 0.0
    %314 = vmatprep.subr.mxu0 0.0
    %315 = vmatpush2.msra.mxu0 0.0
    %316 = vmatprep.subr.mxu0 0.0
    %317 = vmatpush2.msra.mxu0 0.0
    %318 = vmatprep.subr.mxu0 0.0
    %319 = vmatpush2.msra.mxu0 0.0
    %320 = vmatprep.subr.mxu0 0.0
    %321 = vmatpush2.msra.mxu0 0.0
    %322 = vmatprep.subr.mxu0 0.0
    %323 = vmatpush2.msra.mxu0 0.0
    %324 = vmatprep.subr.mxu0 0.0
    %325 = vmatpush2.msra.mxu0 0.0
    %326 = vmatprep.subr.mxu0 0.0
    %327 = vmatpush2.msra.mxu0 0.0
    %328 = vmatprep.mubr.f32.mxu0 0.0
    %329 = vmatmul.mubr.f32.gmra.mxu0 %v75
    %v330 = vpop.f32.mrf.mxu0
    %v331 = vadd.f32 0.0, %v330
    %v332 = vpop.f32.mrf.mxu0
    %333 = vdwg.mxu0
    %v334 = vmul.f32 %v159, 0.70710677
    %335 = vst [vmem:[#allocation10] sm:$0xff] %v334
    %336 = vst [vmem:[#allocation11] sm:$0xff] %v245
    %337 = vst [vmem:[#allocation13] sm:$0xff] %v331
    // Predicated region
    $region34: #{tpu_custom_call.1} parent=1 // pred_check
      _
    $region35: #{tpu_custom_call.1} parent=1 // pred_check_branch
      %339 = sbr.rel (0) target = $region37
    $region36: #{tpu_custom_call.1} parent=1 // pred_region
      %s341 = ssub.s32 128, 128
      %342 = vsyncadd [#allocation4], %s341
      %s344 = sshll.u32 [#allocation10], 4
      %s345 = int_to_ptr.vmem [resolvable:$true] %s344
      %347 = dma.vmem_to_hbm [thread:$0]  %s345, 128, %s4, [#allocation4]
    $region37: #{tpu_custom_call.1} parent=1 // pred_fallthru
      _
    // Predicated region
    $region38: #{tpu_custom_call.1} parent=1 // pred_check
      _
    $region39: #{tpu_custom_call.1} parent=1 // pred_check_branch
      %349 = sbr.rel (0) target = $region41
    $region40: #{tpu_custom_call.1} parent=1 // pred_region
      %s351 = ssub.s32 128, 128
      %352 = vsyncadd [#allocation12], %s351
      %s354 = sshll.u32 [#allocation11], 4
      %s355 = int_to_ptr.vmem [resolvable:$true] %s354
      %357 = dma.vmem_to_hbm [thread:$0]  %s355, 128, %s5, [#allocation12]
    $region41: #{tpu_custom_call.1} parent=1 // pred_fallthru
      _
    // Predicated region
    $region42: #{tpu_custom_call.1} parent=1 // pred_check
      _
    $region43: #{tpu_custom_call.1} parent=1 // pred_check_branch
      %359 = sbr.rel (0) target = $region45
    $region44: #{tpu_custom_call.1} parent=1 // pred_region
      %s361 = ssub.s32 128, 128
      %362 = vsyncadd [#allocation12], %s361
      %s364 = sshll.u32 [#allocation13], 4
      %s365 = int_to_ptr.vmem [resolvable:$true] %s364
      %367 = dma.vmem_to_hbm [thread:$0]  %s365, 128, %s6, [#allocation12]
    $region45: #{tpu_custom_call.1} parent=1 // pred_fallthru
      _
    // Predicated region
    $region46: #{tpu_custom_call.1} parent=1 // pred_check
      _
    $region47: #{tpu_custom_call.1} parent=1 // pred_check_branch
      %369 = sbr.rel (0) target = $region49
    $region48: #{tpu_custom_call.1} parent=1 // pred_region
      %370 = dma.done [#allocation4], 128
    $region49: #{tpu_custom_call.1} parent=1 // pred_fallthru
      _
    // Predicated region
    $region50: #{tpu_custom_call.1} parent=1 // pred_check
      _
    $region51: #{tpu_custom_call.1} parent=1 // pred_check_branch
      %372 = sbr.rel (0) target = $region53
    $region52: #{tpu_custom_call.1} parent=1 // pred_region
      %373 = dma.done [#allocation12], 128
    $region53: #{tpu_custom_call.1} parent=1 // pred_fallthru
      _
    // Predicated region
    $region54: #{tpu_custom_call.1} parent=1 // pred_check
      _
    $region55: #{tpu_custom_call.1} parent=1 // pred_check_branch
      %375 = sbr.rel (0) target = $region57
    $region56: #{tpu_custom_call.1} parent=1 // pred_region
      %376 = dma.done [#allocation12], 128
    $region57: #{tpu_custom_call.1} parent=1 // pred_fallthru
      _
    %377 = vsyncpa [#allocation3], 1
    %378 = vsyncpa [#allocation6], 1
    %379 = vsyncpa [#allocation9], 1
    %380 = vsyncpa [#allocation4], 1
    %381 = vsyncpa [#allocation12], 1

</llo_original>
